<compile_context>
chip_gen: v5e
topology: v5e:2x2
jax: 0.10.0
libtpu: 0.0.40
codegen_flags: <defaults>
</compile_context>

<pallas_src>
import numpy as np
import jax
import jax.numpy as jnp
from jax.experimental import pallas as pl
from jax.experimental.pallas import tpu as pltpu

NEG_SLOPE = 0.01  # torch.nn.LeakyReLU default


def _round_up(n, m):
    return ((n + m - 1) // m) * m


def _aug_width(din):
    """Feature rows of the augmented input [x ; cond ; 1 ; 0-pad], aligned to 16."""
    return _round_up(din + 2, 16)


def _leaky_relu(h):
    return jnp.where(h >= 0, h, NEG_SLOPE * h)


def _logsigmoid(z):
    # numerically stable log(sigmoid(z)) = min(z, 0) - log1p(exp(-|z|))
    return jnp.minimum(z, 0.0) - jnp.log1p(jnp.exp(-jnp.abs(z)))


def _joint_y_kernel(x_ref, ct_ref, *refs):
    """Transposed (batch-on-lanes) forward.

    x_ref : (F, TB)  bf16   rows = [x ; cond ; 1 ; 0-pad]
    ct_ref: (2, TB)  f32    rows = [logit_alpha ; terminal]
    refs  : packed trunk layers (layers 0..num_layers-2), packed folded head, out_ref
       trunk layer 0 : (H, F)    bf16  [W_x | w_cond | b | 0]   (pure matmul vs x_ref)
       trunk layer l : (H, H+1)  bf16  [W | b]
       folded head   : (4, K+2)  bf16  [W_heads @ W_last | cond_col | b_fold]
    out_ref: (4, TB) f32  rows = flat (2,2) log-prob table per batch column.
    """
    out_ref = refs[-1]
    params = refs[:-1]
    num_trunk = len(params) - 1

    la = ct_ref[0:1, :]                 # (1, TB) logit_alpha
    tm = ct_ref[1:2, :]                 # (1, TB) terminal
    cond = la * (1.0 - tm)              # (1, TB)

    # --- trunk (all layers except the last one, which is folded into the head) ---
    h = x_ref[...]                      # bf16 (F, TB)
    for l in range(num_trunk):
        p = params[l][...]
        if l == 0:
            z = jnp.dot(p, h, preferred_element_type=jnp.float32)
        else:
            n = p.shape[1] - 1
            z = (jnp.dot(p[:, :n], h, preferred_element_type=jnp.float32)
                 + p[:, n:n + 1].astype(jnp.float32))
        h = _leaky_relu(z).astype(jnp.bfloat16)

    # --- folded heads: one (4, K) matmul; rows 0..2 = non_term logits, row 3 = term ---
    ph = params[num_trunk][...]
    K = ph.shape[1] - 2
    y = (jnp.dot(ph[:, :K], h, preferred_element_type=jnp.float32)
         + cond * ph[:, K:K + 1].astype(jnp.float32)
         + ph[:, K + 1:K + 2].astype(jnp.float32))               # (4, TB) f32

    row = jax.lax.broadcasted_iota(jnp.int32, y.shape, 0)        # (4, TB)
    t = y[3:4, :]                                                # (1, TB) term logit

    # non-terminal branch: log_softmax over rows [nt0, nt1, nt2, 0]
    logits4 = jnp.where(row < 3, y, 0.0)
    m = jnp.max(logits4, axis=0, keepdims=True)
    lse = m + jnp.log(jnp.sum(jnp.exp(logits4 - m), axis=0, keepdims=True))
    nt_lp = logits4 - lse                                        # (4, TB)

    # terminal branch: outer sum of logsigmoid pairs, two fused (4,TB) logsigmoid calls
    tla = t - la
    u = jnp.where(row < 2, -t, t)                 # rows: [-t, -t, t, t]
    v = jnp.where((row & 1) == 0, -tla, tla)      # rows: [-tla, tla, -tla, tla]
    term_lp = _logsigmoid(u) + _logsigmoid(v)     # (4, TB)

    # single lane-dense (4, TB) store
    out_ref[...] = nt_lp * (1.0 - tm) + term_lp * tm


def joint_y_classifier_param(x, logit_alpha, terminal, packed_params, *, block_b=2048):
    """x: (B, ndim*horizon); logit_alpha, terminal: (B,). Returns (B, 2, 2) log-probs."""
    x = x.astype(jnp.float32)
    B, din = x.shape
    F = _aug_width(din)
    la = logit_alpha.astype(jnp.float32)
    tm = terminal.astype(jnp.float32)
    cond = la * (1.0 - tm)

    # augmented input rows [x ; cond ; 1 ; 0-pad]: trunk layer 0 becomes a pure matmul
    xaug = jnp.concatenate(
        [x, cond[:, None], jnp.ones((B, 1), jnp.float32),
         jnp.zeros((B, F - (din + 2)), jnp.float32)], axis=1)     # (B, F)
    ct = jnp.stack([la, tm], axis=1)                              # (B, 2)

    # Batch tile: multiple of 128 (lane axis), large to amortize the ~0.35us per-grid-step
    # overhead; split into >=2 tiles when the batch allows so ("parallel",) can shard the
    # grid across v7x's two TensorCores.  VMEM footprint at TB=2048 is well under 1 MiB.
    Bp128 = _round_up(B, 128)
    TB = min(block_b, Bp128)
    if Bp128 >= 256 and Bp128 // TB < 2:
        TB = _round_up((Bp128 + 1) // 2, 128)
    Bp = _round_up(B, TB)
    if Bp != B:
        xaug = jnp.pad(xaug, ((0, Bp - B), (0, 0)))
        ct = jnp.pad(ct, ((0, Bp - B), (0, 0)))

    xaug_t = xaug.T.astype(jnp.bfloat16)    # (F, Bp)  bf16 MXU operand (halves input DMA)
    ct_t = ct.T                              # (2, Bp)  f32, used by the epilogue

    in_specs = [
        pl.BlockSpec((F, TB), lambda i: (0, i)),
        pl.BlockSpec((2, TB), lambda i: (0, i)),
    ] + [pl.BlockSpec(p.shape, lambda i: (0, 0)) for p in packed_params]

    out = pl.pallas_call(
        _joint_y_kernel,
        out_shape=jax.ShapeDtypeStruct((4, Bp), jnp.float32),
        grid=(Bp // TB,),
        in_specs=in_specs,
        out_specs=pl.BlockSpec((4, TB), lambda i: (0, i)),
        compiler_params=pltpu.CompilerParams(dimension_semantics=("parallel",)),
    )(xaug_t, ct_t, *packed_params)
    return out.T[:B].reshape(B, 2, 2)


# ----------------------------------------------------------------------------- params ---

def _linear_init(key, fan_in, fan_out):
    """Deterministic torch.nn.Linear-style init; weights stored (out, in) like torch."""
    kw, kb = jax.random.split(key)
    bound = 1.0 / np.sqrt(fan_in)
    w = jax.random.uniform(kw, (fan_out, fan_in), jnp.float32, -bound, bound)
    b = jax.random.uniform(kb, (fan_out,), jnp.float32, -bound, bound)
    return w, b


def init_params(key, horizon, ndim, num_hidden, num_layers):
    din = ndim * horizon
    keys = jax.random.split(key, num_layers + 2)
    sizes = [din + 1] + [num_hidden] * num_layers
    trunk = [_linear_init(keys[l], sizes[l], sizes[l + 1]) for l in range(num_layers)]
    nt_head = _linear_init(keys[num_layers], num_hidden + 1, 3)
    t_head = _linear_init(keys[num_layers + 1], num_hidden, 1)
    return trunk, nt_head, t_head


def pack_params(trunk, nt_head, t_head, num_layers, dtype=jnp.bfloat16):
    """Host-side packing + folding (all folds done in f32, then cast to bf16).

    - trunk layer 0 packed as [W_x | w_cond | b | 0-pad]  (consumed by [x; cond; 1; 0])
    - middle trunk layers packed as [W | b]
    - the LAST trunk layer (no activation after it) is folded into the two heads:
        y = W_heads @ (W_last h + b_last) + cond_col*cond + b_heads
          = (W_heads @ W_last) h + cond_col*cond + (W_heads @ b_last + b_heads)
    """
    wnt, bnt = nt_head                                   # (3, H+1), (3,)
    wt, bt = t_head                                      # (1, H),   (1,)
    H = wt.shape[1]
    w_heads = jnp.concatenate([wnt[:, :H], wt], axis=0)                               # (4, H)
    cond_col = jnp.concatenate([wnt[:, H:H + 1], jnp.zeros((1, 1), jnp.float32)], 0)  # (4, 1)
    b_heads = jnp.concatenate([bnt, bt])[:, None]                                     # (4, 1)

    w0, b0 = trunk[0]                                    # (H, din+1), (H,)
    din = w0.shape[1] - 1
    F = _aug_width(din)
    w0_aug = jnp.concatenate(
        [w0, b0[:, None], jnp.zeros((w0.shape[0], F - (din + 2)), jnp.float32)], axis=1)  # (H, F)

    packed = []
    if num_layers == 1:
        w_fold = w_heads @ w0_aug                                                  # (4, F)
        packed.append(jnp.concatenate([w_fold, cond_col, b_heads], 1).astype(dtype))
        return packed

    packed.append(w0_aug.astype(dtype))                                            # (H, F)
    for l in range(1, num_layers - 1):
        w, b = trunk[l]
        packed.append(jnp.concatenate([w, b[:, None]], axis=1).astype(dtype))      # (H, H+1)
    wl, bl = trunk[num_layers - 1]
    w_fold = w_heads @ wl                                                          # (4, H)
    b_fold = w_heads @ bl[:, None] + b_heads                                       # (4, 1)
    packed.append(jnp.concatenate([w_fold, cond_col, b_fold], 1).astype(dtype))    # (4, H+2)
    return packed


# -------------------------------------------------------------------------- reference ---

def reference(x, logit_alpha, terminal, trunk, nt_head, t_head, num_layers):
    """Pure-JAX f32 reference mirroring the PyTorch forward exactly."""
    cond = logit_alpha * (1.0 - terminal)
    h = jnp.concatenate([x, cond[:, None]], axis=1)
    for n, (w, b) in enumerate(trunk):
        h = h @ w.T + b
        if n < num_layers - 1:
            h = jnp.where(h >= 0, h, NEG_SLOPE * h)
    wnt, bnt = nt_head
    wt, bt = t_head
    nt = jnp.concatenate([h, cond[:, None]], axis=1) @ wnt.T + bnt
    t = h @ wt.T + bt
    nt_tmp = jnp.concatenate([nt, jnp.zeros_like(nt[:, :1])], axis=1)
    nt_lp = jax.nn.log_softmax(nt_tmp, axis=1)
    a = jax.nn.log_sigmoid(-t)
    b_ = jax.nn.log_sigmoid(t)
    c = jax.nn.log_sigmoid(-(t - logit_alpha[:, None]))
    d = jax.nn.log_sigmoid(t - logit_alpha[:, None])
    ab = jnp.concatenate([a, b_], axis=1)
    cd = jnp.concatenate([c, d], axis=1)
    tlp = (ab[:, :, None] + cd[:, None, :]).reshape(-1, 4)
    tv = terminal.reshape(-1, 1)
    lp = nt_lp * (1.0 - tv) + tlp * tv
    return lp.reshape(-1, 2, 2)


if __name__ == "__main__":
    key = jax.random.PRNGKey(0)

    # (horizon, ndim, num_hidden, num_layers, batch) — second config exercises the
    # middle-trunk-layer path, batch padding and a >=2 tile grid.
    for (horizon, ndim, num_hidden, num_layers, B) in [(8, 2, 32, 2, 8),
                                                       (8, 2, 32, 3, 300)]:
        key, kp, kx, ka, kt = jax.random.split(key, 5)
        trunk, nt_head, t_head = init_params(kp, horizon, ndim, num_hidden, num_layers)
        packed = pack_params(trunk, nt_head, t_head, num_layers)

        x = jax.random.normal(kx, (B, ndim * horizon), jnp.float32)
        logit_alpha = jax.random.normal(ka, (B,), jnp.float32)
        terminal = (jax.random.uniform(kt, (B,)) > 0.5).astype(jnp.float32)

        out = jax.block_until_ready(
            joint_y_classifier_param(x, logit_alpha, terminal, packed))
        ref = reference(x, logit_alpha, terminal, trunk, nt_head, t_head, num_layers)
        # bf16 MXU operands (f32 accumulation / epilogue) => slightly looser tolerance.
        np.testing.assert_allclose(np.asarray(out), np.asarray(ref), rtol=2e-2, atol=2e-2)

    print("KERNEL_OK")
</pallas_src>

<mosaic_0001>
module attributes {stable_mosaic.version = 11 : i64} {
  func.func @_joint_y_kernel(%arg0: i32, %arg1: memref<32x128xbf16, #tpu.memory_space<vmem>>, %arg2: memref<2x128xf32, #tpu.memory_space<vmem>>, %arg3: memref<32x32xbf16, #tpu.memory_space<vmem>>, %arg4: memref<4x34xbf16, #tpu.memory_space<vmem>>, %arg5: memref<4x128xf32, #tpu.memory_space<vmem>>) attributes {dimension_semantics = [#tpu.dimension_semantics<parallel>], iteration_bounds = array<i64: 1>, scalar_prefetch = 0 : i64, scratch_operands = 0 : i64, tpu.core_type = #tpu.core_type<tc>, window_params = [{transform_indices = @transform_0, window_bounds = array<i64: 32, 128>}, {transform_indices = @transform_1, window_bounds = array<i64: 2, 128>}, {pipeline_mode = #tpu.pipeline_mode<synchronous>, transform_indices = @transform_2, window_bounds = array<i64: 32, 32>}, {pipeline_mode = #tpu.pipeline_mode<synchronous>, transform_indices = @transform_3, window_bounds = array<i64: 4, 34>}, {transform_indices = @transform_4, window_bounds = array<i64: 4, 128>}]} {
    %c0 = arith.constant 0 : index
    %c0_0 = arith.constant 0 : index
    %0 = vector.load %arg2[%c0, %c0_0] : memref<2x128xf32, #tpu.memory_space<vmem>>, vector<1x128xf32>
    %c1 = arith.constant 1 : index
    %c0_1 = arith.constant 0 : index
    %1 = vector.load %arg2[%c1, %c0_1] : memref<2x128xf32, #tpu.memory_space<vmem>>, vector<1x128xf32>
    %cst = arith.constant 1.000000e+00 : f32
    %2 = vector.broadcast %cst : f32 to vector<1x128xf32>
    %3 = arith.subf %2, %1 : vector<1x128xf32>
    %4 = arith.mulf %0, %3 : vector<1x128xf32>
    %c0_2 = arith.constant 0 : index
    %c0_3 = arith.constant 0 : index
    %5 = vector.load %arg1[%c0_2, %c0_3] : memref<32x128xbf16, #tpu.memory_space<vmem>>, vector<32x128xbf16>
    %c0_4 = arith.constant 0 : index
    %c0_5 = arith.constant 0 : index
    %6 = vector.load %arg3[%c0_4, %c0_5] : memref<32x32xbf16, #tpu.memory_space<vmem>>, vector<32x32xbf16>
    %cst_6 = arith.constant dense<0.000000e+00> : vector<32x128xf32>
    %7 = tpu.matmul %6, %5, %cst_6 {dimension_numbers = #tpu.dot_dimension_numbers<[1], [0], [0], [1], [0, 0, 1, 1], [], []>} : vector<32x32xbf16>, vector<32x128xbf16>, vector<32x128xf32> -> vector<32x128xf32>
    %cst_7 = arith.constant 0.000000e+00 : f32
    %8 = vector.broadcast %cst_7 : f32 to vector<32x128xf32>
    %9 = arith.cmpf oge, %7, %8 : vector<32x128xf32>
    %cst_8 = arith.constant 0.00999999977 : f32
    %10 = vector.broadcast %cst_8 : f32 to vector<32x128xf32>
    %11 = arith.mulf %10, %7 : vector<32x128xf32>
    %12 = arith.select %9, %7, %11 : vector<32x128xi1>, vector<32x128xf32>
    %13 = arith.truncf %12 : vector<32x128xf32> to vector<32x128xbf16>
    %c0_9 = arith.constant 0 : index
    %c0_10 = arith.constant 0 : index
    %14 = vector.load %arg4[%c0_9, %c0_10] : memref<4x34xbf16, #tpu.memory_space<vmem>>, vector<4x34xbf16>
    %15 = vector.extract_strided_slice %14 {offsets = [0, 0], sizes = [4, 32], strides = [1, 1]} : vector<4x34xbf16> to vector<4x32xbf16>
    %cst_11 = arith.constant dense<0.000000e+00> : vector<4x128xf32>
    %16 = tpu.matmul %15, %13, %cst_11 {dimension_numbers = #tpu.dot_dimension_numbers<[1], [0], [0], [1], [0, 0, 1, 1], [], []>} : vector<4x32xbf16>, vector<32x128xbf16>, vector<4x128xf32> -> vector<4x128xf32>
    %17 = vector.extract_strided_slice %14 {offsets = [0, 32], sizes = [4, 1], strides = [1, 1]} : vector<4x34xbf16> to vector<4x1xbf16>
    %18 = arith.extf %17 : vector<4x1xbf16> to vector<4x1xf32>
    %19 = vector.broadcast %4 : vector<1x128xf32> to vector<4x128xf32>
    %20 = vector.broadcast %18 : vector<4x1xf32> to vector<4x128xf32>
    %21 = arith.mulf %19, %20 : vector<4x128xf32>
    %22 = arith.addf %16, %21 : vector<4x128xf32>
    %23 = vector.extract_strided_slice %14 {offsets = [0, 33], sizes = [4, 1], strides = [1, 1]} : vector<4x34xbf16> to vector<4x1xbf16>
    %24 = arith.extf %23 : vector<4x1xbf16> to vector<4x1xf32>
    %25 = vector.broadcast %24 : vector<4x1xf32> to vector<4x128xf32>
    %26 = arith.addf %22, %25 : vector<4x128xf32>
    %27 = tpu.iota {dimensions = array<i32: 0>} : vector<4x128xi32>
    %28 = vector.extract_strided_slice %26 {offsets = [3, 0], sizes = [1, 128], strides = [1, 1]} : vector<4x128xf32> to vector<1x128xf32>
    %c3_i32 = arith.constant 3 : i32
    %29 = vector.broadcast %c3_i32 : i32 to vector<4x128xi32>
    %30 = arith.cmpi slt, %27, %29 : vector<4x128xi32>
    %cst_12 = arith.constant 0.000000e+00 : f32
    %31 = vector.broadcast %cst_12 : f32 to vector<4x128xf32>
    %32 = arith.select %30, %26, %31 : vector<4x128xi1>, vector<4x128xf32>
    %cst_13 = arith.constant dense<0xFF800000> : vector<128xf32>
    %33 = vector.multi_reduction <maximumf>, %32, %cst_13 [0] : vector<4x128xf32> to vector<128xf32>
    %34 = vector.shape_cast %33 : vector<128xf32> to vector<1x128xf32>
    %35 = vector.broadcast %34 : vector<1x128xf32> to vector<4x128xf32>
    %36 = arith.subf %32, %35 : vector<4x128xf32>
    %37 = math.exp %36 : vector<4x128xf32>
    %cst_14 = arith.constant dense<0.000000e+00> : vector<128xf32>
    %38 = vector.multi_reduction <add>, %37, %cst_14 [0] : vector<4x128xf32> to vector<128xf32>
    %39 = vector.shape_cast %38 : vector<128xf32> to vector<1x128xf32>
    %40 = math.log %39 : vector<1x128xf32>
    %41 = arith.addf %34, %40 : vector<1x128xf32>
    %42 = vector.broadcast %41 : vector<1x128xf32> to vector<4x128xf32>
    %43 = arith.subf %32, %42 : vector<4x128xf32>
    %44 = arith.subf %28, %0 : vector<1x128xf32>
    %c2_i32 = arith.constant 2 : i32
    %45 = vector.broadcast %c2_i32 : i32 to vector<4x128xi32>
    %46 = arith.cmpi slt, %27, %45 : vector<4x128xi32>
    %cst_15 = arith.constant 0.000000e+00 : f32
    %47 = vector.broadcast %cst_15 : f32 to vector<1x128xf32>
    %48 = arith.subf %47, %28 : vector<1x128xf32>
    %49 = vector.shape_cast %48 : vector<1x128xf32> to vector<1x128xf32>
    %50 = vector.broadcast %49 : vector<1x128xf32> to vector<4x128xf32>
    %51 = vector.shape_cast %28 : vector<1x128xf32> to vector<1x128xf32>
    %52 = vector.broadcast %51 : vector<1x128xf32> to vector<4x128xf32>
    %53 = arith.select %46, %50, %52 : vector<4x128xi1>, vector<4x128xf32>
    %c1_i32 = arith.constant 1 : i32
    %54 = vector.broadcast %c1_i32 : i32 to vector<4x128xi32>
    %55 = arith.andi %27, %54 : vector<4x128xi32>
    %c0_i32 = arith.constant 0 : i32
    %56 = vector.broadcast %c0_i32 : i32 to vector<4x128xi32>
    %57 = arith.cmpi eq, %55, %56 : vector<4x128xi32>
    %cst_16 = arith.constant 0.000000e+00 : f32
    %58 = vector.broadcast %cst_16 : f32 to vector<1x128xf32>
    %59 = arith.subf %58, %44 : vector<1x128xf32>
    %60 = vector.shape_cast %59 : vector<1x128xf32> to vector<1x128xf32>
    %61 = vector.broadcast %60 : vector<1x128xf32> to vector<4x128xf32>
    %62 = vector.shape_cast %44 : vector<1x128xf32> to vector<1x128xf32>
    %63 = vector.broadcast %62 : vector<1x128xf32> to vector<4x128xf32>
    %64 = arith.select %57, %61, %63 : vector<4x128xi1>, vector<4x128xf32>
    %cst_17 = arith.constant 0.000000e+00 : f32
    %65 = vector.broadcast %cst_17 : f32 to vector<4x128xf32>
    %66 = arith.minimumf %53, %65 : vector<4x128xf32>
    %67 = math.absf %53 : vector<4x128xf32>
    %cst_18 = arith.constant 0.000000e+00 : f32
    %68 = vector.broadcast %cst_18 : f32 to vector<4x128xf32>
    %69 = arith.subf %68, %67 : vector<4x128xf32>
    %70 = math.exp %69 : vector<4x128xf32>
    %71 = math.log1p %70 : vector<4x128xf32>
    %72 = arith.subf %66, %71 : vector<4x128xf32>
    %cst_19 = arith.constant 0.000000e+00 : f32
    %73 = vector.broadcast %cst_19 : f32 to vector<4x128xf32>
    %74 = arith.minimumf %64, %73 : vector<4x128xf32>
    %75 = math.absf %64 : vector<4x128xf32>
    %cst_20 = arith.constant 0.000000e+00 : f32
    %76 = vector.broadcast %cst_20 : f32 to vector<4x128xf32>
    %77 = arith.subf %76, %75 : vector<4x128xf32>
    %78 = math.exp %77 : vector<4x128xf32>
    %79 = math.log1p %78 : vector<4x128xf32>
    %80 = arith.subf %74, %79 : vector<4x128xf32>
    %81 = arith.addf %72, %80 : vector<4x128xf32>
    %cst_21 = arith.constant 1.000000e+00 : f32
    %82 = vector.broadcast %cst_21 : f32 to vector<1x128xf32>
    %83 = arith.subf %82, %1 : vector<1x128xf32>
    %84 = vector.broadcast %83 : vector<1x128xf32> to vector<4x128xf32>
    %85 = arith.mulf %43, %84 : vector<4x128xf32>
    %86 = vector.broadcast %1 : vector<1x128xf32> to vector<4x128xf32>
    %87 = arith.mulf %81, %86 : vector<4x128xf32>
    %88 = arith.addf %85, %87 : vector<4x128xf32>
    %c0_22 = arith.constant 0 : index
    %c0_23 = arith.constant 0 : index
    %89 = vector.load %arg5[%c0_22, %c0_23] : memref<4x128xf32, #tpu.memory_space<vmem>>, vector<4x128xf32>
    tpu.vector_store %arg5[%c0_22, %c0_23], %88 {strides = array<i32>} : memref<4x128xf32, #tpu.memory_space<vmem>>, vector<4x128xf32>,
    return
  }
  func.func @transform_0(%arg0: i32) -> (i32, i32) {
    %c0_i32 = arith.constant 0 : i32
    %c0_i32_0 = arith.constant 0 : i32
    return %c0_i32, %arg0 : i32, i32
  }
  func.func @transform_1(%arg0: i32) -> (i32, i32) {
    %c0_i32 = arith.constant 0 : i32
    %c0_i32_0 = arith.constant 0 : i32
    return %c0_i32, %arg0 : i32, i32
  }
  func.func @transform_2(%arg0: i32) -> (i32, i32) {
    %c0_i32 = arith.constant 0 : i32
    %c0_i32_0 = arith.constant 0 : i32
    %c0_i32_1 = arith.constant 0 : i32
    return %c0_i32, %c0_i32_0 : i32, i32
  }
  func.func @transform_3(%arg0: i32) -> (i32, i32) {
    %c0_i32 = arith.constant 0 : i32
    %c0_i32_0 = arith.constant 0 : i32
    %c0_i32_1 = arith.constant 0 : i32
    return %c0_i32, %c0_i32_0 : i32, i32
  }
  func.func @transform_4(%arg0: i32) -> (i32, i32) {
    %c0_i32 = arith.constant 0 : i32
    %c0_i32_0 = arith.constant 0 : i32
    return %c0_i32, %arg0 : i32, i32
  }
}

</mosaic_0001>

<llo_original>
// kernel: tpu_custom_call.1
$region0: #{tpu_custom_call.1}
  #allocation0 [shape = 'u32[]', space=smem, size = 0x4, offset = 0x4, fixed_abs, tag = 'smem constant byte address 0x4 - core index']
  #allocation1 [shape = 'u32[72,128]{1,0:T(1,128)}', space=vmem, size = 0x9000, scoped, tag = 'internal scratch']
  %s0 = inlined_call_operand.hbm [shape: bf16[32,128], index: 0, kind: input, shape index: {}]
  %s1 = inlined_call_operand.hbm [shape: f32[2,128], index: 1, kind: input, shape index: {}]
  %s2 = inlined_call_operand.hbm [shape: bf16[32,32], index: 2, kind: input, shape index: {}]
  %s3 = inlined_call_operand.vmem [shape: bf16[4,34], index: 3, kind: input, shape index: {}]
  %s4 = inlined_call_operand.hbm [shape: f32[4,128], index: 4, kind: output, shape index: {}]
  %s5 = sld [smem:[#allocation0]]
  $region38: #{tpu_custom_call.1} parent=0
    _
  %s7 = ssub.s32 1, %s5
  %s8 = scalar_select 0, %s7, %s5
  $region1: #{tpu_custom_call.1} parent=0
    #allocation2 [shape = 'u8[8192]{0}', space=vmem, size = 0x2000, scoped, tag = 'input window, operand 0, single buffered']
    #allocation3 [shape = 's32[1]{0}', space=sflag, size = 0x4, scoped, tag = 'scoped memory for tpu_custom_call.1']
    #allocation4 [shape = 's32[1]{0}', space=sflag, size = 0x4, scoped, tag = 'scoped memory for tpu_custom_call.1']
    #allocation5 [shape = 'u8[1024]{0}', space=vmem, size = 0x400, scoped, tag = 'input window, operand 1, single buffered']
    #allocation6 [shape = 's32[1]{0}', space=sflag, size = 0x4, scoped, tag = 'scoped memory for tpu_custom_call.1']
    #allocation7 [shape = 'u8[8192]{0}', space=vmem, size = 0x2000, scoped, tag = 'input window, operand 2, single buffered']
    #allocation8 [shape = 'u8[2048]{0}', space=vmem, size = 0x800, scoped, tag = 'output window, operand 0, single buffered']
    %9 = vsyncpa [#allocation3], 0
    %10 = vsyncpa [#allocation6], 0
    %11 = vsyncpa [#allocation4], 0
    // Predicated region
    $region2: #{tpu_custom_call.1} parent=1 // pred_check
      _
    $region3: #{tpu_custom_call.1} parent=1 // pred_check_branch
      %13 = sbr.rel (0) target = $region5
    $region4: #{tpu_custom_call.1} parent=1 // pred_region
      %15 = vsyncadd [#allocation3], 0
      %s16 = sshll.u32 %s0, 4
      %s17 = int_to_ptr.hbm [resolvable:$true] %s16
      %s18 = sshll.u32 [#allocation2], 4
      %s19 = int_to_ptr.vmem [resolvable:$true] %s18
      %24 = dma.hbm_to_vmem [thread:$0]  %s17, 256, %s19, [#allocation3], 64, 64, 4
    $region5: #{tpu_custom_call.1} parent=1 // pred_fallthru
      _
    // Predicated region
    $region6: #{tpu_custom_call.1} parent=1 // pred_check
      _
    $region7: #{tpu_custom_call.1} parent=1 // pred_check_branch
      %26 = sbr.rel (0) target = $region9
    $region8: #{tpu_custom_call.1} parent=1 // pred_region
      %28 = vsyncadd [#allocation6], 0
      %s30 = sshll.u32 %s1, 4
      %s31 = int_to_ptr.hbm [resolvable:$true] %s30
      %s32 = sshll.u32 [#allocation5], 4
      %s33 = int_to_ptr.vmem [resolvable:$true] %s32
      %35 = dma.hbm_to_vmem [thread:$0]  %s31, 32, %s33, [#allocation6]
    $region9: #{tpu_custom_call.1} parent=1 // pred_fallthru
      _
    // Predicated region
    $region10: #{tpu_custom_call.1} parent=1 // pred_check
      _
    $region11: #{tpu_custom_call.1} parent=1 // pred_check_branch
      %37 = sbr.rel (0) target = $region13
    $region12: #{tpu_custom_call.1} parent=1 // pred_region
      %39 = vsyncadd [#allocation6], 0
      %s40 = sshll.u32 %s2, 4
      %s41 = int_to_ptr.hbm [resolvable:$true] %s40
      %s42 = sshll.u32 [#allocation7], 4
      %s43 = int_to_ptr.vmem [resolvable:$true] %s42
      %48 = dma.hbm_to_vmem [thread:$0]  %s41, 256, %s43, [#allocation6], 64, 64, 4
    $region13: #{tpu_custom_call.1} parent=1 // pred_fallthru
      _
    // Predicated region
    $region14: #{tpu_custom_call.1} parent=1 // pred_check
      _
    $region15: #{tpu_custom_call.1} parent=1 // pred_check_branch
      %50 = sbr.rel (0) target = $region17
    $region16: #{tpu_custom_call.1} parent=1 // pred_region
      _
    $region17: #{tpu_custom_call.1} parent=1 // pred_fallthru
      _
    // Predicated region
    $region18: #{tpu_custom_call.1} parent=1 // pred_check
      _
    $region19: #{tpu_custom_call.1} parent=1 // pred_check_branch
      %52 = sbr.rel (0) target = $region21
    $region20: #{tpu_custom_call.1} parent=1 // pred_region
      %54 = dma.done [#allocation3], 256
    $region21: #{tpu_custom_call.1} parent=1 // pred_fallthru
      _
    // Predicated region
    $region22: #{tpu_custom_call.1} parent=1 // pred_check
      _
    $region23: #{tpu_custom_call.1} parent=1 // pred_check_branch
      %56 = sbr.rel (0) target = $region25
    $region24: #{tpu_custom_call.1} parent=1 // pred_region
      %58 = dma.done [#allocation6], 32
    $region25: #{tpu_custom_call.1} parent=1 // pred_fallthru
      _
    // Predicated region
    $region26: #{tpu_custom_call.1} parent=1 // pred_check
      _
    $region27: #{tpu_custom_call.1} parent=1 // pred_check_branch
      %60 = sbr.rel (0) target = $region29
    $region28: #{tpu_custom_call.1} parent=1 // pred_region
      %62 = dma.done [#allocation6], 256
    $region29: #{tpu_custom_call.1} parent=1 // pred_fallthru
      _
    %v64 = vld [vmem:[#allocation5] sm:$0x1]
    %v65 = vld [vmem:[#allocation5 + $0x1] sm:$0x1]
    %v66 = vsub.f32 1.0, %v65
    %v67 = vmul.f32 %v64, %v66
    %v68 = vld [vmem:[#allocation2] sm:$0xf]
    %v69 = vld [vmem:[#allocation2 + $0x4] sm:$0xf]
    %v70 = vld [vmem:[#allocation2 + $0x8] sm:$0xf]
    %v71 = vld [vmem:[#allocation2 + $0xc] sm:$0xf]
    %v72 = vld [vmem:[#allocation7] sm:$0xf]
    %v73 = vld [vmem:[#allocation7 + $0x4] sm:$0xf]
    %v74 = vld [vmem:[#allocation7 + $0x8] sm:$0xf]
    %v75 = vld [vmem:[#allocation7 + $0xc] sm:$0xf]
    %v80 = vunpack.c.l.b16 %v72
    %v81 = vunpack.c.l.b16 %v73
    %v82 = vunpack.c.l.b16 %v74
    %v83 = vunpack.c.l.b16 %v75
    %v84 = vpack.c.b16 %v81, %v80
    %v85 = vpack.c.b16 %v83, %v82
    %v90 = vunpack.c.l.b16 %v68
    %v91 = vunpack.c.l.b16 %v69
    %v92 = vunpack.c.l.b16 %v70
    %v93 = vunpack.c.l.b16 %v71
    %v94 = vpack.c.b16 %v91, %v90
    %v95 = vpack.c.b16 %v93, %v92
    %vm98 = vcmask 261120
    %v100 = vsel %vm98, %v84, 0
    %v103 = vsel %vm98, %v85, 0
    %105 = vmatpush.bf16.msra.mxu0 0
    %106 = vmatpush.bf16.msra.mxu0 0
    %107 = vmatpush.bf16.msra.mxu0 0
    %108 = vmatpush.bf16.msra.mxu0 0
    %109 = vmatpush.bf16.msra.mxu0 0
    %110 = vmatpush.bf16.msra.mxu0 0
    %111 = vmatpush.bf16.msra.mxu0 %v95
    %112 = vmatpush.bf16.msra.mxu0 %v94
    %113 = vmatmul.bf16.gmra.mxu0 %v100
    %v114 = vpop.f32.mrf.mxu0
    %v115 = vadd.f32 0.0, %v114
    %v116 = vpop.f32.mrf.mxu0
    %v117 = vadd.f32 0.0, %v116
    %118 = vmatmul.bf16.gmra.mxu0 %v103
    %v119 = vpop.f32.mrf.mxu0
    %v120 = vadd.f32 0.0, %v119
    %v121 = vpop.f32.mrf.mxu0
    %v122 = vadd.f32 0.0, %v121
    %123 = vdwg.mxu0
    %vm124 = vcmp.ge.f32.partialorder %v115, 0.0
    %vm125 = vcmp.ge.f32.partialorder %v117, 0.0
    %vm126 = vcmp.ge.f32.partialorder %v120, 0.0
    %vm127 = vcmp.ge.f32.partialorder %v122, 0.0
    %v128 = vmul.f32 %v115, 0.01
    %v129 = vmul.f32 %v117, 0.01
    %v130 = vmul.f32 %v120, 0.01
    %v131 = vmul.f32 %v122, 0.01
    %v132 = vsel %vm124, %v115, %v128
    %v133 = vsel %vm125, %v117, %v129
    %v134 = vsel %vm126, %v120, %v130
    %v135 = vsel %vm127, %v122, %v131
    %v136 = vpack.c.bf16 %v133, %v132
    %v137 = vpack.c.bf16 %v135, %v134
    %v138 = vld [vmem:[%s3] sm:$0x3]
    %v139 = vunpack.c.l.bf16 %v138
    %v140 = vperm.slane %v67, 0
    %142 = vset.pattern.permute.xlu0 32
    %143 = vperm.xlu0 %142, %v139
    %v144 = vpop.permute.xlu0 %143
    %v147 = vunpack.c.l.s4 839922192
    %v148 = vunpack.c.0.s8 %v147
    %v149 = vperm.slane %v144, %v148
    %v150 = vmul.f32 %v140, %v149
    %v152 = vsel %vm98, %v138, 0
    %154 = vmatpush.bf16.msra.mxu0 0
    %155 = vmatpush.bf16.msra.mxu0 0
    %156 = vmatpush.bf16.msra.mxu0 0
    %157 = vmatpush.bf16.msra.mxu0 0
    %158 = vmatpush.bf16.msra.mxu0 0
    %159 = vmatpush.bf16.msra.mxu0 0
    %160 = vmatpush.bf16.msra.mxu0 %v137
    %161 = vmatpush.bf16.msra.mxu0 %v136
    %162 = vmatmul.bf16.gmra.mxu0 %v152
    %v163 = vpop.f32.mrf.mxu0
    %v164 = vadd.f32 %v150, %v163
    %v165 = vpop.f32.mrf.mxu0
    %166 = vdwg.mxu0
    %167 = vset.pattern.permute.xlu0 33
    %168 = vperm.xlu0 %167, %v139
    %v169 = vpop.permute.xlu0 %168
    %v172 = vunpack.c.l.s4 839922192
    %v173 = vunpack.c.0.s8 %v172
    %v174 = vperm.slane %v169, %v173
    %v175 = vadd.f32 %v164, %v174
    %v176 = vlaneseq
    %v177 = vshrl.u32 %v176, 7
    %vm178 = vcmp.lt.s32.totalorder %v177, 3
    %v179 = vsel %vm178, %v175, 0.0
    %vm180 = vcmask 1043456
    %v181 = vsel %vm180, %v179, -inf
    %v182 = vrot.slane %v181, 4
    %v183 = vmax.f32 %v181, %v182
    %v184 = vrot.slane %v183, 2
    %v185 = vmax.f32 %v183, %v184
    %v186 = vrot.slane %v185, 1
    %v187 = vmax.f32 %v185, %v186
    %v188 = vsub.f32 %v179, %v187
    %v189 = vmul.f32 %v188, 1.442695
    %v190 = vpow.pop %v189
    %v191 = vsel %vm180, %v190, 0.0
    %v192 = vrot.slane %v191, 4
    %v193 = vadd.f32 %v191, %v192
    %v194 = vrot.slane %v193, 2
    %v195 = vadd.f32 %v193, %v194
    %v196 = vrot.slane %v195, 1
    %v197 = vadd.f32 %v195, %v196
    %v198 = vlog2.pop %v197
    %v199 = vmul.f32 %v198, 0.6931472
    %v200 = vadd.f32 %v187, %v199
    %v201 = vsub.f32 %v179, %v200
    %v203 = vrot.slane %v64, 5
    %v205 = vsub.f32 %v175, %v203
    %vm206 = vcmp.lt.s32.totalorder %v177, 2
    %v207 = vsub.f32 0.0, %v175
    %v208 = vperm.slane %v207, 3
    %v209 = vperm.slane %v175, 3
    %v210 = vsel %vm206, %v208, %v209
    %v211 = vand.u32 %v177, 1
    %vm212 = vcmp.eq.s32.totalorder %v211, 0
    %v213 = vsub.f32 0.0, %v205
    %v214 = vperm.slane %v213, 3
    %v215 = vperm.slane %v205, 3
    %v216 = vsel %vm212, %v214, %v215
    %v217 = vmin.f32 %v210, 0.0
    %v218 = vand.u32 2147483647, %v210
    %v219 = vsub.f32 0.0, %v218
    %v220 = vmul.f32 %v219, 1.442695
    %v221 = vpow.pop %v220
    %v222 = vadd.f32 %v221, 1.0
    %v223 = vlog2.pop %v222
    %v224 = vmul.f32 %v223, 0.6931472
    %v225 = vmul.f32 -0.5, %v221
    %v226 = vadd.f32 %v225, 1.0
    %v227 = vmul.f32 %v226, %v221
    %v228 = vand.u32 2147483647, %v221
    %vm229 = vcmp.lt.f32.partialorder %v228, 0.0004427343
    %v230 = vsel %vm229, %v227, %v224
    %v231 = vsub.f32 %v217, %v230
    %v232 = vmin.f32 %v216, 0.0
    %v233 = vand.u32 2147483647, %v216
    %v234 = vsub.f32 0.0, %v233
    %v235 = vmul.f32 %v234, 1.442695
    %v236 = vpow.pop %v235
    %v237 = vadd.f32 %v236, 1.0
    %v238 = vlog2.pop %v237
    %v239 = vmul.f32 %v238, 0.6931472
    %v240 = vmul.f32 -0.5, %v236
    %v241 = vadd.f32 %v240, 1.0
    %v242 = vmul.f32 %v241, %v236
    %v243 = vand.u32 2147483647, %v236
    %vm244 = vcmp.lt.f32.partialorder %v243, 0.0004427343
    %v245 = vsel %vm244, %v242, %v239
    %v246 = vsub.f32 %v232, %v245
    %v247 = vadd.f32 %v231, %v246
    %v248 = vperm.slane %v66, 0
    %v249 = vmul.f32 %v201, %v248
    %v250 = vperm.slane %v65, 0
    %v251 = vmul.f32 %v247, %v250
    %v252 = vadd.f32 %v249, %v251
    %253 = vst [vmem:[#allocation8] sm:$0xf] %v252
    // Predicated region
    $region30: #{tpu_custom_call.1} parent=1 // pred_check
      _
    $region31: #{tpu_custom_call.1} parent=1 // pred_check_branch
      %255 = sbr.rel (0) target = $region33
    $region32: #{tpu_custom_call.1} parent=1 // pred_region
      %257 = vsyncadd [#allocation4], 0
      %s259 = sshll.u32 [#allocation8], 4
      %s260 = int_to_ptr.vmem [resolvable:$true] %s259
      %s261 = sshll.u32 %s4, 4
      %s262 = int_to_ptr.hbm [resolvable:$true] %s261
      %264 = dma.vmem_to_hbm [thread:$0]  %s260, 64, %s262, [#allocation4]
    $region33: #{tpu_custom_call.1} parent=1 // pred_fallthru
      _
    // Predicated region
    $region34: #{tpu_custom_call.1} parent=1 // pred_check
      _
    $region35: #{tpu_custom_call.1} parent=1 // pred_check_branch
      %266 = sbr.rel (0) target = $region37
    $region36: #{tpu_custom_call.1} parent=1 // pred_region
      %268 = dma.done [#allocation4], 64
    $region37: #{tpu_custom_call.1} parent=1 // pred_fallthru
      _
    %269 = vsyncpa [#allocation3], 1
    %270 = vsyncpa [#allocation6], 1
    %271 = vsyncpa [#allocation4], 1

</llo_original>
